<compile_context>
chip_gen: v7x
topology: tpu7x:2x2x1
jax: 0.10.0
libtpu: 0.0.40
codegen_flags: <defaults>
</compile_context>

<pallas_src>
import jax
import jax.numpy as jnp
from jax.experimental import pallas as pl
from jax.experimental.pallas import tpu as pltpu


_LANES = 512                                   # lane-dense width (multiple of 128)
_ROW_TILE = 256                                # rows per grid step (multiple of 8)
_F32_MIN = float(jnp.finfo(jnp.float32).min)   # finite init for running max
_VMEM_LIMIT = 32 * 1024 * 1024


def _reduce_kernel(x_ref, logz_ref, m_sc, s_sc):
    """Pass 1: streaming global max / sum-of-exp (online-softmax update)."""
    i = pl.program_id(0)

    @pl.when(i == 0)
    def _init():
        m_sc[...] = jnp.full_like(m_sc, _F32_MIN)
        s_sc[...] = jnp.zeros_like(s_sc)

    x = x_ref[...].astype(jnp.float32)                     # (TR, L)
    blk_max = jnp.max(x, axis=0, keepdims=True)            # (1, L) per-lane (VPU-heavy)
    m_old = m_sc[...]
    m_new = jnp.maximum(m_old, blk_max)                    # finite (init is f32 min)
    alpha = jnp.exp(m_old - m_new)                         # rescale previous partial sums
    p = jnp.exp(x - m_new)                                 # EUP; -inf padding -> 0
    s_sc[...] = s_sc[...] * alpha + jnp.sum(p, axis=0, keepdims=True)
    m_sc[...] = m_new

    @pl.when(i == pl.num_programs(0) - 1)
    def _finalize():
        c = jnp.max(m_sc[...])                             # single cross-lane (XLU) reduce
        z = jnp.sum(s_sc[...] * jnp.exp(m_sc[...] - c))    # global sum of exp(x - c)
        logz_ref[0] = c + jnp.log(z)                       # softmax shift


def _normalize_kernel(logz_ref, x_ref, o_ref):
    """Pass 2: out = exp(x - (c + log sum exp(x - c))) — division-free."""
    shift = logz_ref[0]
    x = x_ref[...].astype(jnp.float32)
    o_ref[...] = jnp.exp(x - shift).astype(o_ref.dtype)


def softmax_stable(x: jax.Array) -> jax.Array:
    """Global stable softmax (matches SoftmaxStable.forward)."""
    orig_shape = x.shape
    orig_dtype = x.dtype

    flat = x.reshape(-1)
    total = flat.shape[0]

    # Lane-dense 2-D slab: (rows, _LANES), last (fast) axis on TPU lanes.
    rows = pl.cdiv(total, _LANES)
    if rows <= _ROW_TILE:
        tile_rows = max(rows, 1)
        padded_rows = tile_rows
    else:
        tile_rows = _ROW_TILE
        padded_rows = pl.cdiv(rows, _ROW_TILE) * _ROW_TILE
    padded_total = padded_rows * _LANES

    if padded_total != total:
        # -inf padding: exp(-inf - anything_finite) == 0, never affects max/sum.
        flat = jnp.pad(flat, (0, padded_total - total), constant_values=-jnp.inf)
    x2d = flat.reshape(padded_rows, _LANES)

    num_tiles = padded_rows // tile_rows
    n = padded_total
    itemsize = jnp.dtype(orig_dtype).itemsize

    # ---- Pass 1: scalar log-partition -------------------------------------
    logz = pl.pallas_call(
        _reduce_kernel,
        out_shape=jax.ShapeDtypeStruct((1,), jnp.float32),
        grid=(num_tiles,),
        in_specs=[pl.BlockSpec((tile_rows, _LANES), lambda i: (i, 0))],
        out_specs=pl.BlockSpec(memory_space=pltpu.MemorySpace.SMEM),
        scratch_shapes=[pltpu.VMEM((1, _LANES), jnp.float32),   # running max m
                        pltpu.VMEM((1, _LANES), jnp.float32)],  # running sum s
        compiler_params=pltpu.CompilerParams(
            dimension_semantics=("arbitrary",),
            vmem_limit_bytes=_VMEM_LIMIT,
        ),
        cost_estimate=pl.CostEstimate(
            flops=4 * n, transcendentals=2 * n, bytes_accessed=n * itemsize),
    )(x2d)

    # ---- Pass 2: recompute-exp normalize (fully parallel over row tiles) ---
    out2d = pl.pallas_call(
        _normalize_kernel,
        out_shape=jax.ShapeDtypeStruct((padded_rows, _LANES), orig_dtype),
        grid=(num_tiles,),
        in_specs=[pl.BlockSpec(memory_space=pltpu.MemorySpace.SMEM),
                  pl.BlockSpec((tile_rows, _LANES), lambda i: (i, 0))],
        out_specs=pl.BlockSpec((tile_rows, _LANES), lambda i: (i, 0)),
        compiler_params=pltpu.CompilerParams(
            dimension_semantics=("parallel",),
            vmem_limit_bytes=_VMEM_LIMIT,
        ),
        cost_estimate=pl.CostEstimate(
            flops=n, transcendentals=n, bytes_accessed=2 * n * itemsize),
    )(logz, x2d)

    return out2d.reshape(-1)[:total].reshape(orig_shape)


if __name__ == "__main__":
    key1, key2 = jax.random.split(jax.random.PRNGKey(0))

    # Case 1: small shape consistent with the module's forward (seq=8, hidden=32).
    x1 = jax.random.normal(key1, (8, 32), dtype=jnp.float32) * 10.0
    out1 = jax.block_until_ready(softmax_stable(x1))
    c1 = jnp.max(x1)
    ref1 = jnp.exp(x1 - c1) / jnp.sum(jnp.exp(x1 - c1))
    assert out1.shape == x1.shape and out1.dtype == x1.dtype
    assert jnp.allclose(out1, ref1, atol=1e-6, rtol=1e-5)
    assert jnp.allclose(jnp.sum(out1), 1.0, atol=1e-5)

    # Case 2: odd shape exercising -inf padding + the multi-tile (grid=2) path.
    x2 = jax.random.normal(key2, (300, 523), dtype=jnp.float32) * 5.0
    out2 = jax.block_until_ready(softmax_stable(x2))
    c2 = jnp.max(x2)
    ref2 = jnp.exp(x2 - c2) / jnp.sum(jnp.exp(x2 - c2))
    assert out2.shape == x2.shape and out2.dtype == x2.dtype
    assert jnp.allclose(out2, ref2, atol=1e-6, rtol=1e-5)
    assert jnp.allclose(jnp.sum(out2), 1.0, atol=1e-4)

    print("KERNEL_OK")
</pallas_src>

<mosaic_0001>
module attributes {stable_mosaic.version = 11 : i64} {
  func.func @_reduce_kernel(%arg0: i32, %arg1: memref<1x512xf32, #tpu.memory_space<vmem>>, %arg2: memref<1xf32, #tpu.memory_space<smem>>, %arg3: memref<1x512xf32, #tpu.memory_space<vmem>>, %arg4: memref<1x512xf32, #tpu.memory_space<vmem>>) attributes {dimension_semantics = [#tpu.dimension_semantics<arbitrary>], iteration_bounds = array<i64: 1>, scalar_prefetch = 0 : i64, scratch_operands = 2 : i64, tpu.core_type = #tpu.core_type<tc>, window_params = [{transform_indices = @transform_0, window_bounds = array<i64: 1, 512>}, {transform_indices = @transform_1, window_bounds = array<i64: 1>}]} {
    %c0_i32 = arith.constant 0 : i32
    %0 = arith.cmpi eq, %arg0, %c0_i32 : i32
    %1 = arith.extui %0 : i1 to i32
    %c0_i32_0 = arith.constant 0 : i32
    %2 = arith.cmpi ne, %1, %c0_i32_0 : i32
    scf.if %2 {
      %cst_13 = arith.constant -3.40282347E+38 : f32
      %22 = vector.broadcast %cst_13 : f32 to vector<1x512xf32>
      %c0_14 = arith.constant 0 : index
      %c0_15 = arith.constant 0 : index
      %23 = vector.load %arg3[%c0_14, %c0_15] : memref<1x512xf32, #tpu.memory_space<vmem>>, vector<1x512xf32>
      tpu.vector_store %arg3[%c0_14, %c0_15], %22 {strides = array<i32>} : memref<1x512xf32, #tpu.memory_space<vmem>>, vector<1x512xf32>,
      %cst_16 = arith.constant 0.000000e+00 : f32
      %24 = vector.broadcast %cst_16 : f32 to vector<1x512xf32>
      %c0_17 = arith.constant 0 : index
      %c0_18 = arith.constant 0 : index
      %25 = vector.load %arg4[%c0_17, %c0_18] : memref<1x512xf32, #tpu.memory_space<vmem>>, vector<1x512xf32>
      tpu.vector_store %arg4[%c0_17, %c0_18], %24 {strides = array<i32>} : memref<1x512xf32, #tpu.memory_space<vmem>>, vector<1x512xf32>,
    } else {
    }
    %c0 = arith.constant 0 : index
    %c0_1 = arith.constant 0 : index
    %3 = vector.load %arg1[%c0, %c0_1] : memref<1x512xf32, #tpu.memory_space<vmem>>, vector<1x512xf32>
    %cst = arith.constant dense<0xFF800000> : vector<512xf32>
    %4 = vector.multi_reduction <maximumf>, %3, %cst [0] : vector<1x512xf32> to vector<512xf32>
    %5 = vector.shape_cast %4 : vector<512xf32> to vector<1x512xf32>
    %c0_2 = arith.constant 0 : index
    %c0_3 = arith.constant 0 : index
    %6 = vector.load %arg3[%c0_2, %c0_3] : memref<1x512xf32, #tpu.memory_space<vmem>>, vector<1x512xf32>
    %7 = arith.maximumf %6, %5 : vector<1x512xf32>
    %8 = arith.subf %6, %7 : vector<1x512xf32>
    %9 = math.exp %8 : vector<1x512xf32>
    %10 = arith.subf %3, %7 : vector<1x512xf32>
    %11 = math.exp %10 : vector<1x512xf32>
    %c0_4 = arith.constant 0 : index
    %c0_5 = arith.constant 0 : index
    %12 = vector.load %arg4[%c0_4, %c0_5] : memref<1x512xf32, #tpu.memory_space<vmem>>, vector<1x512xf32>
    %13 = arith.mulf %12, %9 : vector<1x512xf32>
    %cst_6 = arith.constant dense<0.000000e+00> : vector<512xf32>
    %14 = vector.multi_reduction <add>, %11, %cst_6 [0] : vector<1x512xf32> to vector<512xf32>
    %15 = vector.shape_cast %14 : vector<512xf32> to vector<1x512xf32>
    %16 = arith.addf %13, %15 : vector<1x512xf32>
    %c0_7 = arith.constant 0 : index
    %c0_8 = arith.constant 0 : index
    %17 = vector.load %arg4[%c0_7, %c0_8] : memref<1x512xf32, #tpu.memory_space<vmem>>, vector<1x512xf32>
    tpu.vector_store %arg4[%c0_7, %c0_8], %16 {strides = array<i32>} : memref<1x512xf32, #tpu.memory_space<vmem>>, vector<1x512xf32>,
    %c0_9 = arith.constant 0 : index
    %c0_10 = arith.constant 0 : index
    %18 = vector.load %arg3[%c0_9, %c0_10] : memref<1x512xf32, #tpu.memory_space<vmem>>, vector<1x512xf32>
    tpu.vector_store %arg3[%c0_9, %c0_10], %7 {strides = array<i32>} : memref<1x512xf32, #tpu.memory_space<vmem>>, vector<1x512xf32>,
    %c0_i32_11 = arith.constant 0 : i32
    %19 = arith.cmpi eq, %arg0, %c0_i32_11 : i32
    %20 = arith.extui %19 : i1 to i32
    %c0_i32_12 = arith.constant 0 : i32
    %21 = arith.cmpi ne, %20, %c0_i32_12 : i32
    scf.if %21 {
      %c0_13 = arith.constant 0 : index
      %c0_14 = arith.constant 0 : index
      %22 = vector.load %arg3[%c0_13, %c0_14] : memref<1x512xf32, #tpu.memory_space<vmem>>, vector<1x512xf32>
      %23 = vector.shape_cast %22 : vector<1x512xf32> to vector<1x1x512xf32>
      %cst_15 = arith.constant dense<0xFF800000> : vector<1xf32>
      %24 = vector.multi_reduction <maximumf>, %23, %cst_15 [1, 2] : vector<1x1x512xf32> to vector<1xf32>
      %25 = vector.shape_cast %24 : vector<1xf32> to vector<1x1x1xf32>
      %26 = vector.extract %25[0, 0, 0] : f32 from vector<1x1x1xf32>
      %c0_16 = arith.constant 0 : index
      %c0_17 = arith.constant 0 : index
      %27 = vector.load %arg4[%c0_16, %c0_17] : memref<1x512xf32, #tpu.memory_space<vmem>>, vector<1x512xf32>
      %c0_18 = arith.constant 0 : index
      %c0_19 = arith.constant 0 : index
      %28 = vector.load %arg3[%c0_18, %c0_19] : memref<1x512xf32, #tpu.memory_space<vmem>>, vector<1x512xf32>
      %29 = vector.broadcast %26 : f32 to vector<1x512xf32>
      %30 = arith.subf %28, %29 : vector<1x512xf32>
      %31 = math.exp %30 : vector<1x512xf32>
      %32 = arith.mulf %27, %31 : vector<1x512xf32>
      %33 = vector.shape_cast %32 : vector<1x512xf32> to vector<1x1x512xf32>
      %cst_20 = arith.constant dense<0.000000e+00> : vector<1xf32>
      %34 = vector.multi_reduction <add>, %33, %cst_20 [1, 2] : vector<1x1x512xf32> to vector<1xf32>
      %35 = vector.shape_cast %34 : vector<1xf32> to vector<1x1x1xf32>
      %36 = vector.extract %35[0, 0, 0] : f32 from vector<1x1x1xf32>
      %37 = math.log %36 : f32
      %38 = arith.addf %26, %37 : f32
      %c0_21 = arith.constant 0 : index
      %39 = memref.load %arg2[%c0_21] : memref<1xf32, #tpu.memory_space<smem>>
      memref.store %38, %arg2[%c0_21] : memref<1xf32, #tpu.memory_space<smem>>
    } else {
    }
    return
  }
  func.func @transform_0(%arg0: i32) -> (i32, i32) {
    %c0_i32 = arith.constant 0 : i32
    %c0_i32_0 = arith.constant 0 : i32
    return %arg0, %c0_i32 : i32, i32
  }
  func.func @transform_1(%arg0: i32) -> i32 {
    %c0_i32 = arith.constant 0 : i32
    %c0_i32_0 = arith.constant 0 : i32
    return %c0_i32 : i32
  }
}

</mosaic_0001>

<llo_original>
// kernel: tpu_custom_call.1
$region0: #{tpu_custom_call.1}
  #allocation0 [shape = 'u32[]', space=smem, size = 0x4, offset = 0x4, fixed_abs, tag = 'smem constant byte address 0x4 - core index']
  #allocation1 [shape = 'u32[144,128]{1,0:T(1,128)}', space=vmem, size = 0x12000, scoped, tag = 'internal scratch']
  #allocation2 [shape = 'f32[1,512]{1,0:T(1,128)}', space=vmem, size = 0x800, scoped, tag = 'scratch operand']
  #allocation3 [shape = 'f32[1,512]{1,0:T(1,128)}', space=vmem, size = 0x800, scoped, tag = 'scratch operand']
  %s0 = inlined_call_operand.hbm [shape: f32[1,512], index: 0, kind: input, shape index: {}]
  %s1 = inlined_call_operand.hbm [shape: f32[1], index: 1, kind: output, shape index: {}]
  %s2 = sld [smem:[#allocation0]]
  $region26: #{tpu_custom_call.1} parent=0
    _
  %s4 = ssub.s32 1, %s2
  %s5 = scalar_select 0, %s4, %s2
  $region1: #{tpu_custom_call.1} parent=0
    #allocation4 [shape = 'u8[2048]{0}', space=vmem, size = 0x800, scoped, tag = 'input window, operand 0, single buffered']
    #allocation5 [shape = 's32[1]{0}', space=sflag, size = 0x4, scoped, tag = 'scoped memory for tpu_custom_call.1']
    #allocation6 [shape = 's32[1]{0}', space=sflag, size = 0x4, scoped, tag = 'scoped memory for tpu_custom_call.1']
    #allocation7 [shape = 'u8[512]{0}', space=smem, size = 0x200, scoped, tag = 'output window, operand 0, single buffered']
    %6 = vsyncpa [#allocation5], 0
    %7 = vsyncpa [#allocation6], 0
    // Predicated region
    $region2: #{tpu_custom_call.1} parent=1 // pred_check
      _
    $region3: #{tpu_custom_call.1} parent=1 // pred_check_branch
      %9 = sbr.rel (0) target = $region5
    $region4: #{tpu_custom_call.1} parent=1 // pred_region
      %s11 = ssub.s32 64, 64
      %12 = vsyncadd [#allocation5], %s11
      %s14 = sshll.u32 [#allocation4], 4
      %s15 = int_to_ptr.vmem [resolvable:$true] %s14
      %17 = dma.hbm_to_vmem [thread:$0]  %s0, 64, %s15, [#allocation5]
    $region5: #{tpu_custom_call.1} parent=1 // pred_fallthru
      _
    // Predicated region
    $region6: #{tpu_custom_call.1} parent=1 // pred_check
      _
    $region7: #{tpu_custom_call.1} parent=1 // pred_check_branch
      %19 = sbr.rel (0) target = $region9
    $region8: #{tpu_custom_call.1} parent=1 // pred_region
      %20 = dma.done [#allocation5], 64
    $region9: #{tpu_custom_call.1} parent=1 // pred_fallthru
      _
    %p21 = scmp.eq.s32.totalorder 0, 0
    // Predicated region
    $region10: #{tpu_custom_call.1} parent=1 // pred_check
      %p22 = pneg %p21
    $region11: #{tpu_custom_call.1} parent=1 // pred_check_branch
      %24 = sbr.rel (%p22) target = $region13
    $region12: #{tpu_custom_call.1} parent=1 // pred_region
      %v25 = vlaneseq
      %vm26 = vcmp.ge.s32.totalorder %v25, 0
      %vm27 = vcmp.lt.s32.totalorder %v25, 512
      %vm28 = vmand %vm26, %vm27
      %29 = vst.msk [vmem:[#allocation2] sm:$0xf] %vm28, -3.4028235e+38
      %30 = vst.msk [vmem:[#allocation3] sm:$0xf] %vm28, 0.0
    $region13: #{tpu_custom_call.1} parent=1 // pred_fallthru
      _
    %v31 = vld [vmem:[#allocation4] sm:$0xf]
    %v32 = vld [vmem:[#allocation2] sm:$0xf]
    %v33 = vmax.f32 %v32, %v31
    %v34 = vsub.f32 %v32, %v33
    %v35 = vmul.f32 %v34, 1.442695
    %v36 = vpow.pop %v35
    %v37 = vsub.f32 %v31, %v33
    %v38 = vmul.f32 %v37, 1.442695
    %v39 = vpow.pop %v38
    %v40 = vld [vmem:[#allocation3] sm:$0xf]
    %v41 = vmul.f32 %v40, %v36
    %v42 = vadd.f32 %v39, 0.0
    %v43 = vadd.f32 %v41, %v42
    %v44 = vlaneseq
    %vm45 = vcmp.ge.s32.totalorder %v44, 0
    %vm46 = vcmp.lt.s32.totalorder %v44, 512
    %vm47 = vmand %vm45, %vm46
    %48 = vst.msk [vmem:[#allocation3] sm:$0xf] %vm47, %v43
    %49 = vst.msk [vmem:[#allocation2] sm:$0xf] %vm47, %v33
    // Predicated region
    $region14: #{tpu_custom_call.1} parent=1 // pred_check
      %p50 = pneg %p21
    $region15: #{tpu_custom_call.1} parent=1 // pred_check_branch
      %52 = sbr.rel (%p50) target = $region17
    $region16: #{tpu_custom_call.1} parent=1 // pred_region
      %v53 = vld [vmem:[#allocation2] sm:$0xf]
      %v55 = vlaneseq
      %v56 = vshrl.u32 %v55, 7
      %v57 = vsub.s32 0, %v56
      %v58 = vrot.slane %v53, %v57
      %v59 = vlaneseq
      %v60 = vshrl.u32 %v59, 7
      %v61 = vsub.s32 1, %v60
      %v62 = vrot.slane %v53, %v61
      %v63 = vlaneseq
      %v64 = vshrl.u32 %v63, 7
      %v65 = vsub.s32 2, %v64
      %v66 = vrot.slane %v53, %v65
      %v67 = vlaneseq
      %v68 = vshrl.u32 %v67, 7
      %v69 = vsub.s32 3, %v68
      %v70 = vrot.slane %v53, %v69
      %vm75 = vcmask 1040384
      %v76 = vsel %vm75, %v58, -inf
      %v77 = vsel %vm75, %v62, -inf
      %v78 = vsel %vm75, %v66, -inf
      %v79 = vsel %vm75, %v70, -inf
      %v80 = vmax.f32 %v76, %v77
      %v81 = vmax.f32 %v78, %v79
      %v82 = vmax.f32 %v80, %v81
      %83 = vmax.xlane.f32.xlu0 %v82
      %v84 = vpop.xlane.xlu0 %83
      %v85 = vrot.slane %v84, 4
      %v86 = vmax.f32 %v84, %v85
      %v87 = vrot.slane %v86, 2
      %v88 = vmax.f32 %v86, %v87
      %v89 = vrot.slane %v88, 1
      %v90 = vmax.f32 %v88, %v89
      %s91 = vtos %v90
      %v92 = vld [vmem:[#allocation3] sm:$0xf]
      %v93 = vstv %s91
      %v94 = vsub.f32 %v53, %v93
      %v95 = vmul.f32 %v94, 1.442695
      %v96 = vpow.pop %v95
      %v97 = vmul.f32 %v92, %v96
      %v99 = vlaneseq
      %v100 = vshrl.u32 %v99, 7
      %v101 = vsub.s32 0, %v100
      %v102 = vrot.slane %v97, %v101
      %v103 = vlaneseq
      %v104 = vshrl.u32 %v103, 7
      %v105 = vsub.s32 1, %v104
      %v106 = vrot.slane %v97, %v105
      %v107 = vlaneseq
      %v108 = vshrl.u32 %v107, 7
      %v109 = vsub.s32 2, %v108
      %v110 = vrot.slane %v97, %v109
      %v111 = vlaneseq
      %v112 = vshrl.u32 %v111, 7
      %v113 = vsub.s32 3, %v112
      %v114 = vrot.slane %v97, %v113
      %v119 = vsel %vm75, %v102, 0.0
      %v120 = vsel %vm75, %v106, 0.0
      %v121 = vadd.f32 %v119, %v120
      %v122 = vsel %vm75, %v110, 0.0
      %v123 = vadd.f32 %v121, %v122
      %v124 = vsel %vm75, %v114, 0.0
      %v125 = vadd.f32 %v123, %v124
      %126 = vadd.xlane.f32.xlu0 %v125
      %v127 = vpop.xlane.xlu0 %126
      %v128 = vrot.slane %v127, 4
      %v129 = vadd.f32 %v127, %v128
      %v130 = vrot.slane %v129, 2
      %v131 = vadd.f32 %v129, %v130
      %v132 = vrot.slane %v131, 1
      %v133 = vadd.f32 %v131, %v132
      %s134 = vtos %v133
      %v135 = vstv %s134
      %v136 = vlog2.pop %v135
      %v137 = vmul.f32 %v136, 0.6931472
      %s138 = vtos %v137
      %s139 = sadd.f32 %s91, %s138
      %s140 = scalar_lea.smem [#allocation7], 0
      %141 = sst [smem:[%s140]] %s139
    $region17: #{tpu_custom_call.1} parent=1 // pred_fallthru
      _
    // Predicated region
    $region18: #{tpu_custom_call.1} parent=1 // pred_check
      _
    $region19: #{tpu_custom_call.1} parent=1 // pred_check_branch
      %143 = sbr.rel (0) target = $region21
    $region20: #{tpu_custom_call.1} parent=1 // pred_region
      %s145 = ssub.s32 16, 16
      %146 = vsyncadd [#allocation6], %s145
      %149 = dma.smem_to_hbm [#allocation7], 16, %s1, [#allocation6]
    $region21: #{tpu_custom_call.1} parent=1 // pred_fallthru
      _
    // Predicated region
    $region22: #{tpu_custom_call.1} parent=1 // pred_check
      _
    $region23: #{tpu_custom_call.1} parent=1 // pred_check_branch
      %151 = sbr.rel (0) target = $region25
    $region24: #{tpu_custom_call.1} parent=1 // pred_region
      %152 = dma.done [#allocation6], 16
    $region25: #{tpu_custom_call.1} parent=1 // pred_fallthru
      _
    %153 = sfence
    %154 = vsyncpa [#allocation5], 1
    %155 = vsyncpa [#allocation6], 1

</llo_original>
